<compile_context>
chip_gen: v6e
topology: v6e:2x2x1
jax: 0.10.0
libtpu: 0.0.40
codegen_flags: <defaults>
</compile_context>

<pallas_src>
import math
from functools import partial

import jax
import jax.numpy as jnp
from jax import lax
from jax.experimental import pallas as pl
from jax.experimental.pallas import tpu as pltpu


# ----------------------------------------------------------------------------
# Pallas kernel
# ----------------------------------------------------------------------------
def hawkes_kernel(a_src_ref, a_tgt_ref, b_src_ref, b_tgt_ref,
                  t_row_ref, t_col_ref, pbias_ref, sbias_ref,
                  pred_ref, h_ref, *, neg_inv_log_tl, tile):
    # One grid step = one (batch block, target-column block).  Only source-row
    # chunks i <= j contribute to column block j (strict upper triangle).
    j = pl.program_id(1)
    b_blk = pred_ref.shape[0]

    # Target-side operands for this column block (loaded once, loop-invariant).
    a_tgt = a_tgt_ref[...]                               # (Bb, E, T) matmul dtype
    b_tgt = b_tgt_ref[...]
    t_j = t_col_ref[...][:, 0, :]                        # (Bb, T) f32, pre-scaled

    # Static strict-upper mask for the diagonal chunk.  Local coordinates are
    # valid because row-chunk size == column-block size == tile.
    r = lax.broadcasted_iota(jnp.int32, (tile, tile), 0)
    c = lax.broadcasted_iota(jnp.int32, (tile, tile), 1)
    keep_diag = (r < c)[None]                            # (1, T, T)

    def chunk_sum(i_chunk, masked):
        a_src = a_src_ref[i_chunk]                       # (Bb, T, E)
        b_src = b_src_ref[i_chunk]
        t_i = t_row_ref[i_chunk][:, 0, :]                # (Bb, T)
        alphas = jnp.einsum('bie,bej->bij', a_src, a_tgt,
                            preferred_element_type=jnp.float32)
        betas = jnp.clip(
            jnp.einsum('bie,bej->bij', b_src, b_tgt,
                       preferred_element_type=jnp.float32) + 1.0,
            0.0, 10.0)
        # d = log(|t_i - t_j| + 1e-10) * (-1/log(time_log));  expo = betas * d
        # TODO(synk): PyTorch computes delta_t in float64; TPU kernel uses f32.
        d = jnp.log(jnp.abs(t_i[:, :, None] - t_j[:, None, :]) + 1e-10) * neg_inv_log_tl
        expo = betas * d
        if masked:
            # Single select: masked exponent -> -1e30 so exp() == 0 exactly,
            # and alphas * 0 == 0 (no second where needed).
            expo = jnp.where(keep_diag, expo, -1e30)
        cross = alphas * jnp.exp(expo)
        return jnp.sum(cross, axis=-2)                   # (Bb, T)

    # Row chunks strictly below the diagonal: fully inside the kept triangle,
    # no mask work at all.
    def body(i_chunk, acc):
        return acc + chunk_sum(i_chunk, masked=False)

    acc = lax.fori_loop(0, j, body, jnp.zeros((b_blk, tile), jnp.float32))
    # Diagonal chunk (i == j): strict-upper mask.
    acc = acc + chunk_sum(j, masked=True)

    h = pbias_ref[...][:, 0, :] + sbias_ref[...][:, 0, :] + acc
    h_ref[...] = h[:, None, :]
    pred_ref[...] = jax.nn.sigmoid(h)[:, None, :]


# ----------------------------------------------------------------------------
# Wrapper: embedding gathers + layout prep + pallas_call
# ----------------------------------------------------------------------------
def hawkes_forward(params, skills, problems, times, labels, *, time_log,
                   qtest=False, matmul_dtype=jnp.bfloat16,
                   b_blk=None, tile=None):
    B, L = skills.shape
    E = params['alpha_skill'].shape[1]
    skill_num = params['alpha_skill'].shape[0]

    # --- tile / batch-block selection ---------------------------------------
    if tile is None:
        if L <= 256:
            tile = L
        elif L % 128 == 0:
            tile = 128            # small tile keeps live f32 temporaries modest
        else:
            tile = L              # fallback: single column block (dense)
    if b_blk is None:
        # Keep ~6 live (b_blk, tile, tile) f32 temporaries under ~16 MiB and
        # keep B // b_blk >= 2 so both v7x TensorCores get work.
        max_b = max(1, (16 * 1024 * 1024) // (6 * 4 * tile * tile))
        b_blk = 1
        for cand in range(2, 9):
            if cand <= max_b and B % cand == 0 and B // cand >= 2:
                b_blk = cand
    # TODO(synk): pad B / L when not divisible by the block sizes.
    assert B % b_blk == 0 and L % tile == 0
    nj = L // tile

    # --- embedding gathers (data-dependent indexing stays in plain JAX) ------
    inters = skills + labels * skill_num
    mm = matmul_dtype
    a_src = jnp.take(params['alpha_inter'], inters, axis=0).astype(mm)   # (B, L, E)
    a_tgt = jnp.take(params['alpha_skill'], skills, axis=0).astype(mm)   # (B, L, E)
    b_src = jnp.take(params['beta_inter'],  inters, axis=0).astype(mm)   # (B, L, E)
    b_tgt = jnp.take(params['beta_skill'],  skills, axis=0).astype(mm)   # (B, L, E)

    # Chunk-major src operands: (NI, B, tile, E) so the in-kernel row-chunk
    # loop only indexes dim 0 (no dynamic lane/sublane slicing).
    a_src_c = jnp.transpose(a_src.reshape(B, nj, tile, E), (1, 0, 2, 3))
    b_src_c = jnp.transpose(b_src.reshape(B, nj, tile, E), (1, 0, 2, 3))
    # Lane-dense target operands: (B, E, L) so the matmul is 'bie,bej->bij'
    # with no implicit RHS transpose inside the kernel.
    a_tgt_t = jnp.transpose(a_tgt, (0, 2, 1))
    b_tgt_t = jnp.transpose(b_tgt, (0, 2, 1))

    pbias = jnp.take(params['problem_base'], problems, axis=0)[..., 0]   # (B, L)
    sbias = jnp.take(params['skill_base'],   skills,   axis=0)[..., 0]   # (B, L)

    # Pre-scale once; subtract a per-sequence baseline (delta_t is shift-
    # invariant) to reduce f32 cancellation for large absolute timestamps.
    times_f = times.astype(jnp.float32)
    times_f = (times_f - times_f[:, :1]) * (1.0 / 1000.0)
    t_row_c = jnp.transpose(times_f.reshape(B, nj, 1, tile), (1, 0, 2, 3))  # (NI, B, 1, T)
    t_col = times_f.reshape(B, 1, L)
    pbias3 = pbias.reshape(B, 1, L).astype(jnp.float32)
    sbias3 = sbias.reshape(B, 1, L).astype(jnp.float32)

    grid = (B // b_blk, nj)

    src_spec = pl.BlockSpec((nj, b_blk, tile, E), lambda b, j: (0, b, 0, 0))   # resident
    tgt_spec = pl.BlockSpec((b_blk, E, tile),     lambda b, j: (b, 0, j))
    trow_spec = pl.BlockSpec((nj, b_blk, 1, tile), lambda b, j: (0, b, 0, 0))  # resident
    col_spec = pl.BlockSpec((b_blk, 1, tile),     lambda b, j: (b, 0, j))

    pairs = B * L * (L + tile) // 2            # (i, j) pairs actually computed
    mm_bytes = jnp.dtype(mm).itemsize
    cost = pl.CostEstimate(
        flops=int(4 * E * pairs),              # two batched matmuls on the triangle
        transcendentals=int(2 * pairs + B * L),
        bytes_accessed=int(4 * B * L * E * mm_bytes + 6 * B * L * 4),
    )

    pred, h = pl.pallas_call(
        partial(hawkes_kernel,
                neg_inv_log_tl=-1.0 / math.log(time_log), tile=tile),
        out_shape=(jax.ShapeDtypeStruct((B, 1, L), jnp.float32),
                   jax.ShapeDtypeStruct((B, 1, L), jnp.float32)),
        grid_spec=pltpu.PrefetchScalarGridSpec(
            num_scalar_prefetch=0,
            grid=grid,
            in_specs=[src_spec, tgt_spec,          # alpha src (chunk-major) / tgt
                      src_spec, tgt_spec,          # beta  src (chunk-major) / tgt
                      trow_spec, col_spec,         # times (row chunks, cols)
                      col_spec, col_spec],         # problem / skill bias
            out_specs=(col_spec, col_spec),
        ),
        compiler_params=pltpu.CompilerParams(
            # Both grid axes are independent (each step owns its output block).
            dimension_semantics=("parallel", "parallel"),
            # 48 MiB is safe on v7x (64 MiB physical) and covers the resident
            # src/tgt blocks + temporaries; raise to 64-96 MiB on v5e/v6e if
            # larger b_blk / tile are desired.
            vmem_limit_bytes=48 * 1024 * 1024,
        ),
        cost_estimate=cost,
    )(a_src_c, a_tgt_t, b_src_c, b_tgt_t, t_row_c, t_col, pbias3, sbias3)

    pred = pred.reshape(B, L)
    h = h.reshape(B, L)
    return (pred, h) if qtest else pred


# ----------------------------------------------------------------------------
# Pure-JAX reference (mirrors the PyTorch forward) for a sanity check.
# ----------------------------------------------------------------------------
def hawkes_reference(params, skills, problems, times, labels, *, time_log):
    skill_num = params['alpha_skill'].shape[0]
    inters = skills + labels * skill_num
    a_src = jnp.take(params['alpha_inter'], inters, axis=0)
    a_tgt = jnp.take(params['alpha_skill'], skills, axis=0)
    b_src = jnp.take(params['beta_inter'], inters, axis=0)
    b_tgt = jnp.take(params['beta_skill'], skills, axis=0)
    alphas = jnp.einsum('bie,bje->bij', a_src, a_tgt,
                        preferred_element_type=jnp.float32)
    betas = jnp.clip(jnp.einsum('bie,bje->bij', b_src, b_tgt,
                                preferred_element_type=jnp.float32) + 1.0,
                     0.0, 10.0)
    ts = times.astype(jnp.float32) * (1.0 / 1000.0)
    delta_t = jnp.abs(ts[:, :, None] - ts[:, None, :])
    delta_t = jnp.log(delta_t + 1e-10) / math.log(time_log)
    cross = alphas * jnp.exp(-betas * delta_t)
    L = skills.shape[1]
    keep = jnp.triu(jnp.ones((L, L), dtype=bool), k=1)[None]
    sum_t = jnp.sum(jnp.where(keep, cross, 0.0), axis=-2)
    pbias = jnp.take(params['problem_base'], problems, axis=0)[..., 0]
    sbias = jnp.take(params['skill_base'], skills, axis=0)[..., 0]
    h = pbias + sbias + sum_t
    return jax.nn.sigmoid(h), h


if __name__ == "__main__":
    # Model hyperparameters (synthetic, deterministic)
    n_skills, n_problems, emb_size, time_log = 12, 20, 32, 5.0
    B, L = 2, 8

    key = jax.random.PRNGKey(0)
    keys = jax.random.split(key, 10)

    # Deterministic parameter init ~ N(0, 0.01) like HawkesKT.init_weights
    params = {
        'problem_base': 0.01 * jax.random.normal(keys[0], (n_problems, 1), jnp.float32),
        'skill_base':   0.01 * jax.random.normal(keys[1], (n_skills, 1), jnp.float32),
        'alpha_inter':  0.01 * jax.random.normal(keys[2], (n_skills * 2, emb_size), jnp.float32),
        'alpha_skill':  0.01 * jax.random.normal(keys[3], (n_skills, emb_size), jnp.float32),
        'beta_inter':   0.01 * jax.random.normal(keys[4], (n_skills * 2, emb_size), jnp.float32),
        'beta_skill':   0.01 * jax.random.normal(keys[5], (n_skills, emb_size), jnp.float32),
    }

    # Deterministic example inputs
    skills   = jax.random.randint(keys[6], (B, L), 0, n_skills,   dtype=jnp.int32)
    problems = jax.random.randint(keys[7], (B, L), 0, n_problems, dtype=jnp.int32)
    labels   = jax.random.randint(keys[8], (B, L), 0, 2,          dtype=jnp.int32)
    # monotonically increasing interaction timestamps in milliseconds
    times = jnp.cumsum(
        jax.random.uniform(keys[9], (B, L), jnp.float32, 100.0, 5000.0), axis=1)

    # Production path: bf16 matmul operands, f32 accumulation / elementwise.
    pred = hawkes_forward(params, skills, problems, times, labels,
                          time_log=time_log, qtest=False)
    pred = jax.block_until_ready(pred)

    # f32-operand variant for a tight numerical check against the reference.
    pred_f32, h_f32 = hawkes_forward(params, skills, problems, times, labels,
                                     time_log=time_log, qtest=True,
                                     matmul_dtype=jnp.float32)
    pred_f32, h_f32 = jax.block_until_ready((pred_f32, h_f32))

    ref_pred, ref_h = hawkes_reference(params, skills, problems, times, labels,
                                       time_log=time_log)

    assert pred.shape == (B, L)
    assert bool(jnp.all(jnp.isfinite(pred)))
    assert bool(jnp.allclose(pred_f32, ref_pred, atol=1e-5, rtol=1e-5)), \
        "Pallas kernel (f32 operands) mismatch vs reference (pred)"
    assert bool(jnp.allclose(h_f32, ref_h, atol=1e-4, rtol=1e-4)), \
        "Pallas kernel (f32 operands) mismatch vs reference (h)"
    assert bool(jnp.allclose(pred, ref_pred, atol=2e-3, rtol=2e-2)), \
        "Pallas kernel (bf16 operands) mismatch vs reference (pred)"

    print("KERNEL_OK")
</pallas_src>

<mosaic_0001>
module attributes {stable_mosaic.version = 11 : i64} {
  func.func @hawkes_kernel(%arg0: i32, %arg1: i32, %arg2: memref<1x1x8x32xbf16, #tpu.memory_space<vmem>>, %arg3: memref<1x32x8xbf16, #tpu.memory_space<vmem>>, %arg4: memref<1x1x8x32xbf16, #tpu.memory_space<vmem>>, %arg5: memref<1x32x8xbf16, #tpu.memory_space<vmem>>, %arg6: memref<1x1x1x8xf32, #tpu.memory_space<vmem>>, %arg7: memref<1x1x8xf32, #tpu.memory_space<vmem>>, %arg8: memref<1x1x8xf32, #tpu.memory_space<vmem>>, %arg9: memref<1x1x8xf32, #tpu.memory_space<vmem>>, %arg10: memref<1x1x8xf32, #tpu.memory_space<vmem>>, %arg11: memref<1x1x8xf32, #tpu.memory_space<vmem>>) attributes {dimension_semantics = [#tpu.dimension_semantics<parallel>, #tpu.dimension_semantics<parallel>], iteration_bounds = array<i64: 2, 1>, scalar_prefetch = 0 : i64, scratch_operands = 0 : i64, tpu.core_type = #tpu.core_type<tc>, window_params = [{transform_indices = @transform_0, window_bounds = array<i64: 1, 1, 8, 32>}, {transform_indices = @transform_1, window_bounds = array<i64: 1, 32, 8>}, {transform_indices = @transform_2, window_bounds = array<i64: 1, 1, 8, 32>}, {transform_indices = @transform_3, window_bounds = array<i64: 1, 32, 8>}, {transform_indices = @transform_4, window_bounds = array<i64: 1, 1, 1, 8>}, {transform_indices = @transform_5, window_bounds = array<i64: 1, 1, 8>}, {transform_indices = @transform_6, window_bounds = array<i64: 1, 1, 8>}, {transform_indices = @transform_7, window_bounds = array<i64: 1, 1, 8>}, {transform_indices = @transform_8, window_bounds = array<i64: 1, 1, 8>}, {transform_indices = @transform_9, window_bounds = array<i64: 1, 1, 8>}]} {
    %c0 = arith.constant 0 : index
    %c0_0 = arith.constant 0 : index
    %c0_1 = arith.constant 0 : index
    %0 = vector.load %arg3[%c0, %c0_0, %c0_1] : memref<1x32x8xbf16, #tpu.memory_space<vmem>>, vector<1x32x8xbf16>
    %c0_2 = arith.constant 0 : index
    %c0_3 = arith.constant 0 : index
    %c0_4 = arith.constant 0 : index
    %1 = vector.load %arg5[%c0_2, %c0_3, %c0_4] : memref<1x32x8xbf16, #tpu.memory_space<vmem>>, vector<1x32x8xbf16>
    %c0_5 = arith.constant 0 : index
    %c0_6 = arith.constant 0 : index
    %c0_7 = arith.constant 0 : index
    %2 = vector.load %arg7[%c0_5, %c0_6, %c0_7] : memref<1x1x8xf32, #tpu.memory_space<vmem>>, vector<1x1x8xf32>
    %3 = vector.shape_cast %2 : vector<1x1x8xf32> to vector<1x8xf32>
    %4 = tpu.iota {dimensions = array<i32: 0>} : vector<8x8xi32>
    %5 = tpu.iota {dimensions = array<i32: 1>} : vector<8x8xi32>
    %6 = arith.cmpi slt, %4, %5 : vector<8x8xi32>
    %7 = vector.shape_cast %6 : vector<8x8xi1> to vector<1x8x8xi1>
    %cst = arith.constant 0.000000e+00 : f32
    %8 = vector.broadcast %cst : f32 to vector<1x8xf32>
    %c0_i32 = arith.constant 0 : i32
    %9 = arith.subi %arg1, %c0_i32 : i32
    %10 = arith.addi %c0_i32, %9 : i32
    %c1_i32 = arith.constant 1 : i32
    %11 = scf.for %arg12 = %c0_i32 to %10 step %c1_i32 iter_args(%arg13 = %8) -> (vector<1x8xf32>)  : i32 {
      %63 = arith.index_cast %arg12 : i32 to index
      %c0_39 = arith.constant 0 : index
      %c0_40 = arith.constant 0 : index
      %c0_41 = arith.constant 0 : index
      %64 = vector.load %arg2[%63, %c0_39, %c0_40, %c0_41] : memref<1x1x8x32xbf16, #tpu.memory_space<vmem>>, vector<1x1x8x32xbf16>
      %65 = vector.shape_cast %64 : vector<1x1x8x32xbf16> to vector<1x8x32xbf16>
      %66 = arith.index_cast %arg12 : i32 to index
      %c0_42 = arith.constant 0 : index
      %c0_43 = arith.constant 0 : index
      %c0_44 = arith.constant 0 : index
      %67 = vector.load %arg4[%66, %c0_42, %c0_43, %c0_44] : memref<1x1x8x32xbf16, #tpu.memory_space<vmem>>, vector<1x1x8x32xbf16>
      %68 = vector.shape_cast %67 : vector<1x1x8x32xbf16> to vector<1x8x32xbf16>
      %69 = arith.index_cast %arg12 : i32 to index
      %c0_45 = arith.constant 0 : index
      %c0_46 = arith.constant 0 : index
      %c0_47 = arith.constant 0 : index
      %70 = vector.load %arg6[%69, %c0_45, %c0_46, %c0_47] : memref<1x1x1x8xf32, #tpu.memory_space<vmem>>, vector<1x1x1x8xf32>
      %71 = vector.shape_cast %70 : vector<1x1x1x8xf32> to vector<1x1x8xf32>
      %72 = vector.shape_cast %71 : vector<1x1x8xf32> to vector<1x8xf32>
      "tpu.trace_start"() <{level = 10 : i32, message = "bie,bej->bij"}> : () -> ()
      %cst_48 = arith.constant dense<0.000000e+00> : vector<1x8x8xf32>
      %73 = tpu.matmul %65, %0, %cst_48 {dimension_numbers = #tpu.dot_dimension_numbers<[2], [1], [1], [2], [0, 0, 0, 1, 1, 2], [0], [0]>} : vector<1x8x32xbf16>, vector<1x32x8xbf16>, vector<1x8x8xf32> -> vector<1x8x8xf32>
      %cst_49 = arith.constant dense<0.000000e+00> : vector<1x8x8xf32>
      %74 = tpu.matmul %68, %1, %cst_49 {dimension_numbers = #tpu.dot_dimension_numbers<[2], [1], [1], [2], [0, 0, 0, 1, 1, 2], [0], [0]>} : vector<1x8x32xbf16>, vector<1x32x8xbf16>, vector<1x8x8xf32> -> vector<1x8x8xf32>
      "tpu.trace_stop"() : () -> ()
      %cst_50 = arith.constant 1.000000e+00 : f32
      %75 = vector.broadcast %cst_50 : f32 to vector<1x8x8xf32>
      %76 = arith.addf %74, %75 : vector<1x8x8xf32>
      %cst_51 = arith.constant 0.000000e+00 : f32
      %cst_52 = arith.constant 1.000000e+01 : f32
      %77 = vector.broadcast %cst_51 : f32 to vector<1x8x8xf32>
      %78 = arith.maximumf %77, %76 : vector<1x8x8xf32>
      %79 = vector.broadcast %cst_52 : f32 to vector<1x8x8xf32>
      %80 = arith.minimumf %79, %78 : vector<1x8x8xf32>
      %81 = vector.shape_cast %72 : vector<1x8xf32> to vector<1x8x1xf32>
      %82 = vector.shape_cast %3 : vector<1x8xf32> to vector<1x1x8xf32>
      %83 = vector.broadcast %81 : vector<1x8x1xf32> to vector<1x8x8xf32>
      %84 = vector.broadcast %82 : vector<1x1x8xf32> to vector<1x8x8xf32>
      %85 = arith.subf %83, %84 : vector<1x8x8xf32>
      %86 = math.absf %85 : vector<1x8x8xf32>
      %cst_53 = arith.constant 1.000000e-10 : f32
      %87 = vector.broadcast %cst_53 : f32 to vector<1x8x8xf32>
      %88 = arith.addf %86, %87 : vector<1x8x8xf32>
      %89 = math.log %88 : vector<1x8x8xf32>
      %cst_54 = arith.constant -0.62133491 : f32
      %90 = vector.broadcast %cst_54 : f32 to vector<1x8x8xf32>
      %91 = arith.mulf %89, %90 : vector<1x8x8xf32>
      %92 = arith.mulf %80, %91 : vector<1x8x8xf32>
      %93 = math.exp %92 : vector<1x8x8xf32>
      %94 = arith.mulf %73, %93 : vector<1x8x8xf32>
      %cst_55 = arith.constant dense<0.000000e+00> : vector<1x8xf32>
      %95 = vector.multi_reduction <add>, %94, %cst_55 [1] : vector<1x8x8xf32> to vector<1x8xf32>
      %96 = arith.addf %arg13, %95 : vector<1x8xf32>
      scf.yield %96 : vector<1x8xf32>
    }
    %12 = arith.index_cast %arg1 : i32 to index
    %c0_8 = arith.constant 0 : index
    %c0_9 = arith.constant 0 : index
    %c0_10 = arith.constant 0 : index
    %13 = vector.load %arg2[%12, %c0_8, %c0_9, %c0_10] : memref<1x1x8x32xbf16, #tpu.memory_space<vmem>>, vector<1x1x8x32xbf16>
    %14 = vector.shape_cast %13 : vector<1x1x8x32xbf16> to vector<1x8x32xbf16>
    %15 = arith.index_cast %arg1 : i32 to index
    %c0_11 = arith.constant 0 : index
    %c0_12 = arith.constant 0 : index
    %c0_13 = arith.constant 0 : index
    %16 = vector.load %arg4[%15, %c0_11, %c0_12, %c0_13] : memref<1x1x8x32xbf16, #tpu.memory_space<vmem>>, vector<1x1x8x32xbf16>
    %17 = vector.shape_cast %16 : vector<1x1x8x32xbf16> to vector<1x8x32xbf16>
    %18 = arith.index_cast %arg1 : i32 to index
    %c0_14 = arith.constant 0 : index
    %c0_15 = arith.constant 0 : index
    %c0_16 = arith.constant 0 : index
    %19 = vector.load %arg6[%18, %c0_14, %c0_15, %c0_16] : memref<1x1x1x8xf32, #tpu.memory_space<vmem>>, vector<1x1x1x8xf32>
    %20 = vector.shape_cast %19 : vector<1x1x1x8xf32> to vector<1x1x8xf32>
    %21 = vector.shape_cast %20 : vector<1x1x8xf32> to vector<1x8xf32>
    "tpu.trace_start"() <{level = 10 : i32, message = "bie,bej->bij"}> : () -> ()
    %cst_17 = arith.constant dense<0.000000e+00> : vector<1x8x8xf32>
    %22 = tpu.matmul %14, %0, %cst_17 {dimension_numbers = #tpu.dot_dimension_numbers<[2], [1], [1], [2], [0, 0, 0, 1, 1, 2], [0], [0]>} : vector<1x8x32xbf16>, vector<1x32x8xbf16>, vector<1x8x8xf32> -> vector<1x8x8xf32>
    %cst_18 = arith.constant dense<0.000000e+00> : vector<1x8x8xf32>
    %23 = tpu.matmul %17, %1, %cst_18 {dimension_numbers = #tpu.dot_dimension_numbers<[2], [1], [1], [2], [0, 0, 0, 1, 1, 2], [0], [0]>} : vector<1x8x32xbf16>, vector<1x32x8xbf16>, vector<1x8x8xf32> -> vector<1x8x8xf32>
    "tpu.trace_stop"() : () -> ()
    %cst_19 = arith.constant 1.000000e+00 : f32
    %24 = vector.broadcast %cst_19 : f32 to vector<1x8x8xf32>
    %25 = arith.addf %23, %24 : vector<1x8x8xf32>
    %cst_20 = arith.constant 0.000000e+00 : f32
    %cst_21 = arith.constant 1.000000e+01 : f32
    %26 = vector.broadcast %cst_20 : f32 to vector<1x8x8xf32>
    %27 = arith.maximumf %26, %25 : vector<1x8x8xf32>
    %28 = vector.broadcast %cst_21 : f32 to vector<1x8x8xf32>
    %29 = arith.minimumf %28, %27 : vector<1x8x8xf32>
    %30 = vector.shape_cast %21 : vector<1x8xf32> to vector<1x8x1xf32>
    %31 = vector.shape_cast %3 : vector<1x8xf32> to vector<1x1x8xf32>
    %32 = vector.broadcast %30 : vector<1x8x1xf32> to vector<1x8x8xf32>
    %33 = vector.broadcast %31 : vector<1x1x8xf32> to vector<1x8x8xf32>
    %34 = arith.subf %32, %33 : vector<1x8x8xf32>
    %35 = math.absf %34 : vector<1x8x8xf32>
    %cst_22 = arith.constant 1.000000e-10 : f32
    %36 = vector.broadcast %cst_22 : f32 to vector<1x8x8xf32>
    %37 = arith.addf %35, %36 : vector<1x8x8xf32>
    %38 = math.log %37 : vector<1x8x8xf32>
    %cst_23 = arith.constant -0.62133491 : f32
    %39 = vector.broadcast %cst_23 : f32 to vector<1x8x8xf32>
    %40 = arith.mulf %38, %39 : vector<1x8x8xf32>
    %41 = arith.mulf %29, %40 : vector<1x8x8xf32>
    %cst_24 = arith.constant -1.000000e+30 : f32
    %42 = vector.broadcast %cst_24 : f32 to vector<1x8x8xf32>
    %43 = arith.select %7, %41, %42 : vector<1x8x8xi1>, vector<1x8x8xf32>
    %44 = math.exp %43 : vector<1x8x8xf32>
    %45 = arith.mulf %22, %44 : vector<1x8x8xf32>
    %cst_25 = arith.constant dense<0.000000e+00> : vector<1x8xf32>
    %46 = vector.multi_reduction <add>, %45, %cst_25 [1] : vector<1x8x8xf32> to vector<1x8xf32>
    %47 = arith.addf %11, %46 : vector<1x8xf32>
    %c0_26 = arith.constant 0 : index
    %c0_27 = arith.constant 0 : index
    %c0_28 = arith.constant 0 : index
    %48 = vector.load %arg8[%c0_26, %c0_27, %c0_28] : memref<1x1x8xf32, #tpu.memory_space<vmem>>, vector<1x1x8xf32>
    %49 = vector.shape_cast %48 : vector<1x1x8xf32> to vector<1x8xf32>
    %c0_29 = arith.constant 0 : index
    %c0_30 = arith.constant 0 : index
    %c0_31 = arith.constant 0 : index
    %50 = vector.load %arg9[%c0_29, %c0_30, %c0_31] : memref<1x1x8xf32, #tpu.memory_space<vmem>>, vector<1x1x8xf32>
    %51 = vector.shape_cast %50 : vector<1x1x8xf32> to vector<1x8xf32>
    %52 = arith.addf %49, %51 : vector<1x8xf32>
    %53 = arith.addf %52, %47 : vector<1x8xf32>
    %54 = vector.shape_cast %53 : vector<1x8xf32> to vector<1x1x8xf32>
    %c0_32 = arith.constant 0 : index
    %c0_33 = arith.constant 0 : index
    %c0_34 = arith.constant 0 : index
    %55 = vector.load %arg11[%c0_32, %c0_33, %c0_34] : memref<1x1x8xf32, #tpu.memory_space<vmem>>, vector<1x1x8xf32>
    tpu.vector_store %arg11[%c0_32, %c0_33, %c0_34], %54 {strides = array<i32>} : memref<1x1x8xf32, #tpu.memory_space<vmem>>, vector<1x1x8xf32>,
    %56 = arith.negf %53 : vector<1x8xf32>
    %57 = math.exp %56 : vector<1x8xf32>
    %cst_35 = arith.constant 1.000000e+00 : f32
    %58 = vector.broadcast %cst_35 : f32 to vector<1x8xf32>
    %59 = arith.addf %58, %57 : vector<1x8xf32>
    %60 = arith.divf %58, %59 : vector<1x8xf32>
    %61 = vector.shape_cast %60 : vector<1x8xf32> to vector<1x1x8xf32>
    %c0_36 = arith.constant 0 : index
    %c0_37 = arith.constant 0 : index
    %c0_38 = arith.constant 0 : index
    %62 = vector.load %arg10[%c0_36, %c0_37, %c0_38] : memref<1x1x8xf32, #tpu.memory_space<vmem>>, vector<1x1x8xf32>
    tpu.vector_store %arg10[%c0_36, %c0_37, %c0_38], %61 {strides = array<i32>} : memref<1x1x8xf32, #tpu.memory_space<vmem>>, vector<1x1x8xf32>,
    return
  }
  func.func @transform_0(%arg0: i32, %arg1: i32) -> (i32, i32, i32, i32) {
    %c0_i32 = arith.constant 0 : i32
    %c0_i32_0 = arith.constant 0 : i32
    %c0_i32_1 = arith.constant 0 : i32
    %c0_i32_2 = arith.constant 0 : i32
    return %c0_i32, %arg0, %c0_i32_0, %c0_i32_1 : i32, i32, i32, i32
  }
  func.func @transform_1(%arg0: i32, %arg1: i32) -> (i32, i32, i32) {
    %c0_i32 = arith.constant 0 : i32
    %c0_i32_0 = arith.constant 0 : i32
    return %arg0, %c0_i32, %arg1 : i32, i32, i32
  }
  func.func @transform_2(%arg0: i32, %arg1: i32) -> (i32, i32, i32, i32) {
    %c0_i32 = arith.constant 0 : i32
    %c0_i32_0 = arith.constant 0 : i32
    %c0_i32_1 = arith.constant 0 : i32
    %c0_i32_2 = arith.constant 0 : i32
    return %c0_i32, %arg0, %c0_i32_0, %c0_i32_1 : i32, i32, i32, i32
  }
  func.func @transform_3(%arg0: i32, %arg1: i32) -> (i32, i32, i32) {
    %c0_i32 = arith.constant 0 : i32
    %c0_i32_0 = arith.constant 0 : i32
    return %arg0, %c0_i32, %arg1 : i32, i32, i32
  }
  func.func @transform_4(%arg0: i32, %arg1: i32) -> (i32, i32, i32, i32) {
    %c0_i32 = arith.constant 0 : i32
    %c0_i32_0 = arith.constant 0 : i32
    %c0_i32_1 = arith.constant 0 : i32
    %c0_i32_2 = arith.constant 0 : i32
    return %c0_i32, %arg0, %c0_i32_0, %c0_i32_1 : i32, i32, i32, i32
  }
  func.func @transform_5(%arg0: i32, %arg1: i32) -> (i32, i32, i32) {
    %c0_i32 = arith.constant 0 : i32
    %c0_i32_0 = arith.constant 0 : i32
    return %arg0, %c0_i32, %arg1 : i32, i32, i32
  }
  func.func @transform_6(%arg0: i32, %arg1: i32) -> (i32, i32, i32) {
    %c0_i32 = arith.constant 0 : i32
    %c0_i32_0 = arith.constant 0 : i32
    return %arg0, %c0_i32, %arg1 : i32, i32, i32
  }
  func.func @transform_7(%arg0: i32, %arg1: i32) -> (i32, i32, i32) {
    %c0_i32 = arith.constant 0 : i32
    %c0_i32_0 = arith.constant 0 : i32
    return %arg0, %c0_i32, %arg1 : i32, i32, i32
  }
  func.func @transform_8(%arg0: i32, %arg1: i32) -> (i32, i32, i32) {
    %c0_i32 = arith.constant 0 : i32
    %c0_i32_0 = arith.constant 0 : i32
    return %arg0, %c0_i32, %arg1 : i32, i32, i32
  }
  func.func @transform_9(%arg0: i32, %arg1: i32) -> (i32, i32, i32) {
    %c0_i32 = arith.constant 0 : i32
    %c0_i32_0 = arith.constant 0 : i32
    return %arg0, %c0_i32, %arg1 : i32, i32, i32
  }
}

</mosaic_0001>

<llo_original>
// kernel: tpu_custom_call.1
$region0: #{tpu_custom_call.1}
  #allocation0 [shape = 'u32[]', space=smem, size = 0x4, offset = 0x4, fixed_abs, tag = 'smem constant byte address 0x4 - core index']
  #allocation1 [shape = 'u32[144,128]{1,0:T(1,128)}', space=vmem, size = 0x12000, scoped, tag = 'internal scratch']
  %s0 = inlined_call_operand.vmem [shape: bf16[1,2,8,32], index: 0, kind: input, shape index: {}]
  %s1 = inlined_call_operand.vmem [shape: bf16[2,32,8], index: 1, kind: input, shape index: {}]
  %s2 = inlined_call_operand.vmem [shape: bf16[1,2,8,32], index: 2, kind: input, shape index: {}]
  %s3 = inlined_call_operand.vmem [shape: bf16[2,32,8], index: 3, kind: input, shape index: {}]
  %s4 = inlined_call_operand.vmem [shape: f32[1,2,1,8], index: 4, kind: input, shape index: {}]
  %s5 = inlined_call_operand.vmem [shape: f32[2,1,8], index: 5, kind: input, shape index: {}]
  %s6 = inlined_call_operand.vmem [shape: f32[2,1,8], index: 6, kind: input, shape index: {}]
  %s7 = inlined_call_operand.vmem [shape: f32[2,1,8], index: 7, kind: input, shape index: {}]
  %s8 = inlined_call_operand.hbm [shape: f32[2,1,8], index: 8, kind: output, shape index: {0}]
  %s9 = inlined_call_operand.hbm [shape: f32[2,1,8], index: 9, kind: output, shape index: {1}]
  %10 = xla_tuple %s8, %s9
  %s11 = sld [smem:[#allocation0]]
  $region80: #{tpu_custom_call.1} parent=0
    _
  %s13 = ssub.s32 1, %s11
  %s14 = scalar_select 0, %s13, %s11
  $region1: #{tpu_custom_call.1} parent=0
    #allocation2 [shape = 'u8[1024]{0}', space=vmem, size = 0x400, scoped, tag = 'output window, operand 0']
    #allocation3 [shape = 's32[2]{0}', space=sflag, size = 0x8, scoped, tag = 'scoped memory for tpu_custom_call.1']
    #allocation4 [shape = 'u8[1024]{0}', space=vmem, size = 0x400, scoped, tag = 'output window, operand 1']
    #allocation5 [shape = 's32[2]{0}', space=sflag, size = 0x8, scoped, tag = 'scoped memory for tpu_custom_call.1']
    %15 = vsyncpa [#allocation3], 0
    %s16 = scalar_lea.sflag [#allocation3], 1
    %17 = vsyncpa %s16, 0
    %18 = vsyncpa [#allocation5], 0
    %s19 = scalar_lea.sflag [#allocation5], 1
    %20 = vsyncpa %s19, 0
    loop: start=0, step=1, limit=4
    $region2: #{tpu_custom_call.1} parent=1 // loop_pre_header
      _
    $region3: #{tpu_custom_call.1} parent=1 // loop_header
      %s22 = sphi 0, %s26
      %p23 = scmp.ge.s32.totalorder %s22, 4
      %s29 = sphi 0, %s41
      %s30 = sphi 0, %s37
      %s31 = sphi 0, %s29
      %s32 = sphi 0, %s30
      %s33 = sphi 0, %s31
      %s34 = sphi 0, %s32
      %s44 = sphi 0, %s46
      %s47 = sphi 0, %s44
      %s48 = sphi 0, %s47
      %s64 = sphi 0, %s48
      %s72 = sphi 0, %s74
      %s75 = sphi 0, %s72
      %s76 = sphi 0, %s75
      %s92 = sphi 0, %s76
      %s98 = sphi 0, %s100
      %s101 = sphi 0, %s98
      %s102 = sphi 0, %s101
      %s118 = sphi 0, %s102
      %s126 = sphi 0, %s128
      %s129 = sphi 0, %s126
      %s130 = sphi 0, %s129
      %s146 = sphi 0, %s130
      %s152 = sphi 0, %s154
      %s155 = sphi 0, %s152
      %s156 = sphi 0, %s155
      %s172 = sphi 0, %s156
      %s180 = sphi 0, %s182
      %s183 = sphi 0, %s180
      %s184 = sphi 0, %s183
      %s200 = sphi 0, %s184
      %s208 = sphi 0, %s210
      %s211 = sphi 0, %s208
      %s212 = sphi 0, %s211
      %s228 = sphi 0, %s212
      %s236 = sphi 0, %s238
      %s239 = sphi 0, %s236
      %s240 = sphi 0, %s239
      %s256 = sphi 0, %s240
      %s264 = sphi 0, %s266
      %s267 = sphi 0, %s264
      %s268 = sphi 0, %s267
      %s284 = sphi 0, %s268
      %s292 = sphi 0, %s294
      %s295 = sphi 0, %s292
      %s296 = sphi 0, %s295
      %s312 = sphi 0, %s296
    $region4: #{tpu_custom_call.1} parent=1 // loop_header_branch
      %25 = sbr.rel (%p23) target = $region8
    $region5: #{tpu_custom_call.1} parent=1 // loop_body
      %s27 = ssub.s32 %s22, 1
      %s28 = ssub.s32 %s22, 2
      %s35 = sadd.s32 1, %s30
      %p36 = scmp.ge.s32.totalorder %s35, 1
      %s37 = scalar_select %p36, 0, %s35
      %s38 = sadd.s32 1, %s29
      %s39 = scalar_select %p36, %s38, %s29
      %p40 = scmp.ge.s32.totalorder %s39, 2
      %s41 = scalar_select %p40, 0, %s39
      %s42 = ssub.s32 %s29, %s41
      %p43 = scmp.eq.s32.totalorder %s42, 0
      %s45 = sadd.s32 %s44, 1
      %s46 = scalar_select %p43, %s44, %s45
      %p49 = pneg %p43
      %p50 = scmp.eq.s32.totalorder %s22, 1
      %p51 = por %p49, %p50
      %p52 = scmp.ne.s32.totalorder %s44, %s47
      %p53 = scmp.eq.s32.totalorder %s22, 0
      %p54 = por %p52, %p53
      %p55 = scmp.ne.s32.totalorder %s44, %s47
      %p56 = scmp.eq.s32.totalorder %s27, 1
      %p57 = por %p55, %p56
      %p58 = scmp.ne.s32.totalorder %s47, %s48
      %p59 = scmp.eq.s32.totalorder %s27, 0
      %p60 = por %p58, %p59
      %p61 = scmp.ne.s32.totalorder %s47, %s48
      %p62 = scmp.eq.s32.totalorder %s28, 1
      %p63 = por %p61, %p62
      %p65 = scmp.ne.s32.totalorder %s48, %s64
      %p66 = scmp.eq.s32.totalorder %s28, 0
      %p67 = por %p65, %p66
      %s68 = ssub.s32 %s29, %s41
      %s69 = ssub.s32 %s30, %s37
      %s70 = sor.u32 %s68, %s69
      %p71 = scmp.eq.s32.totalorder %s70, 0
      %s73 = sadd.s32 %s72, 1
      %s74 = scalar_select %p71, %s72, %s73
      %p77 = pneg %p71
      %p78 = scmp.eq.s32.totalorder %s22, 1
      %p79 = por %p77, %p78
      %p80 = scmp.ne.s32.totalorder %s72, %s75
      %p81 = scmp.eq.s32.totalorder %s22, 0
      %p82 = por %p80, %p81
      %p83 = scmp.ne.s32.totalorder %s72, %s75
      %p84 = scmp.eq.s32.totalorder %s27, 1
      %p85 = por %p83, %p84
      %p86 = scmp.ne.s32.totalorder %s75, %s76
      %p87 = scmp.eq.s32.totalorder %s27, 0
      %p88 = por %p86, %p87
      %p89 = scmp.ne.s32.totalorder %s75, %s76
      %p90 = scmp.eq.s32.totalorder %s28, 1
      %p91 = por %p89, %p90
      %p93 = scmp.ne.s32.totalorder %s76, %s92
      %p94 = scmp.eq.s32.totalorder %s28, 0
      %p95 = por %p93, %p94
      %s96 = ssub.s32 %s29, %s41
      %p97 = scmp.eq.s32.totalorder %s96, 0
      %s99 = sadd.s32 %s98, 1
      %s100 = scalar_select %p97, %s98, %s99
      %p103 = pneg %p97
      %p104 = scmp.eq.s32.totalorder %s22, 1
      %p105 = por %p103, %p104
      %p106 = scmp.ne.s32.totalorder %s98, %s101
      %p107 = scmp.eq.s32.totalorder %s22, 0
      %p108 = por %p106, %p107
      %p109 = scmp.ne.s32.totalorder %s98, %s101
      %p110 = scmp.eq.s32.totalorder %s27, 1
      %p111 = por %p109, %p110
      %p112 = scmp.ne.s32.totalorder %s101, %s102
      %p113 = scmp.eq.s32.totalorder %s27, 0
      %p114 = por %p112, %p113
      %p115 = scmp.ne.s32.totalorder %s101, %s102
      %p116 = scmp.eq.s32.totalorder %s28, 1
      %p117 = por %p115, %p116
      %p119 = scmp.ne.s32.totalorder %s102, %s118
      %p120 = scmp.eq.s32.totalorder %s28, 0
      %p121 = por %p119, %p120
      %s122 = ssub.s32 %s29, %s41
      %s123 = ssub.s32 %s30, %s37
      %s124 = sor.u32 %s122, %s123
      %p125 = scmp.eq.s32.totalorder %s124, 0
      %s127 = sadd.s32 %s126, 1
      %s128 = scalar_select %p125, %s126, %s127
      %p131 = pneg %p125
      %p132 = scmp.eq.s32.totalorder %s22, 1
      %p133 = por %p131, %p132
      %p134 = scmp.ne.s32.totalorder %s126, %s129
      %p135 = scmp.eq.s32.totalorder %s22, 0
      %p136 = por %p134, %p135
      %p137 = scmp.ne.s32.totalorder %s126, %s129
      %p138 = scmp.eq.s32.totalorder %s27, 1
      %p139 = por %p137, %p138
      %p140 = scmp.ne.s32.totalorder %s129, %s130
      %p141 = scmp.eq.s32.totalorder %s27, 0
      %p142 = por %p140, %p141
      %p143 = scmp.ne.s32.totalorder %s129, %s130
      %p144 = scmp.eq.s32.totalorder %s28, 1
      %p145 = por %p143, %p144
      %p147 = scmp.ne.s32.totalorder %s130, %s146
      %p148 = scmp.eq.s32.totalorder %s28, 0
      %p149 = por %p147, %p148
      %s150 = ssub.s32 %s29, %s41
      %p151 = scmp.eq.s32.totalorder %s150, 0
      %s153 = sadd.s32 %s152, 1
      %s154 = scalar_select %p151, %s152, %s153
      %p157 = pneg %p151
      %p158 = scmp.eq.s32.totalorder %s22, 1
      %p159 = por %p157, %p158
      %p160 = scmp.ne.s32.totalorder %s152, %s155
      %p161 = scmp.eq.s32.totalorder %s22, 0
      %p162 = por %p160, %p161
      %p163 = scmp.ne.s32.totalorder %s152, %s155
      %p164 = scmp.eq.s32.totalorder %s27, 1
      %p165 = por %p163, %p164
      %p166 = scmp.ne.s32.totalorder %s155, %s156
      %p167 = scmp.eq.s32.totalorder %s27, 0
      %p168 = por %p166, %p167
      %p169 = scmp.ne.s32.totalorder %s155, %s156
      %p170 = scmp.eq.s32.totalorder %s28, 1
      %p171 = por %p169, %p170
      %p173 = scmp.ne.s32.totalorder %s156, %s172
      %p174 = scmp.eq.s32.totalorder %s28, 0
      %p175 = por %p173, %p174
      %s176 = ssub.s32 %s29, %s41
      %s177 = ssub.s32 %s30, %s37
      %s178 = sor.u32 %s176, %s177
      %p179 = scmp.eq.s32.totalorder %s178, 0
      %s181 = sadd.s32 %s180, 1
      %s182 = scalar_select %p179, %s180, %s181
      %p185 = pneg %p179
      %p186 = scmp.eq.s32.totalorder %s22, 1
      %p187 = por %p185, %p186
      %p188 = scmp.ne.s32.totalorder %s180, %s183
      %p189 = scmp.eq.s32.totalorder %s22, 0
      %p190 = por %p188, %p189
      %p191 = scmp.ne.s32.totalorder %s180, %s183
      %p192 = scmp.eq.s32.totalorder %s27, 1
      %p193 = por %p191, %p192
      %p194 = scmp.ne.s32.totalorder %s183, %s184
      %p195 = scmp.eq.s32.totalorder %s27, 0
      %p196 = por %p194, %p195
      %p197 = scmp.ne.s32.totalorder %s183, %s184
      %p198 = scmp.eq.s32.totalorder %s28, 1
      %p199 = por %p197, %p198
      %p201 = scmp.ne.s32.totalorder %s184, %s200
      %p202 = scmp.eq.s32.totalorder %s28, 0
      %p203 = por %p201, %p202
      %s204 = ssub.s32 %s29, %s41
      %s205 = ssub.s32 %s30, %s37
      %s206 = sor.u32 %s204, %s205
      %p207 = scmp.eq.s32.totalorder %s206, 0
      %s209 = sadd.s32 %s208, 1
      %s210 = scalar_select %p207, %s208, %s209
      %p213 = pneg %p207
      %p214 = scmp.eq.s32.totalorder %s22, 1
      %p215 = por %p213, %p214
      %p216 = scmp.ne.s32.totalorder %s208, %s211
      %p217 = scmp.eq.s32.totalorder %s22, 0
      %p218 = por %p216, %p217
      %p219 = scmp.ne.s32.totalorder %s208, %s211
      %p220 = scmp.eq.s32.totalorder %s27, 1
      %p221 = por %p219, %p220
      %p222 = scmp.ne.s32.totalorder %s211, %s212
      %p223 = scmp.eq.s32.totalorder %s27, 0
      %p224 = por %p222, %p223
      %p225 = scmp.ne.s32.totalorder %s211, %s212
      %p226 = scmp.eq.s32.totalorder %s28, 1
      %p227 = por %p225, %p226
      %p229 = scmp.ne.s32.totalorder %s212, %s228
      %p230 = scmp.eq.s32.totalorder %s28, 0
      %p231 = por %p229, %p230
      %s232 = ssub.s32 %s29, %s41
      %s233 = ssub.s32 %s30, %s37
      %s234 = sor.u32 %s232, %s233
      %p235 = scmp.eq.s32.totalorder %s234, 0
      %s237 = sadd.s32 %s236, 1
      %s238 = scalar_select %p235, %s236, %s237
      %p241 = pneg %p235
      %p242 = scmp.eq.s32.totalorder %s22, 1
      %p243 = por %p241, %p242
      %p244 = scmp.ne.s32.totalorder %s236, %s239
      %p245 = scmp.eq.s32.totalorder %s22, 0
      %p246 = por %p244, %p245
      %p247 = scmp.ne.s32.totalorder %s236, %s239
      %p248 = scmp.eq.s32.totalorder %s27, 1
      %p249 = por %p247, %p248
      %p250 = scmp.ne.s32.totalorder %s239, %s240
      %p251 = scmp.eq.s32.totalorder %s27, 0
      %p252 = por %p250, %p251
      %p253 = scmp.ne.s32.totalorder %s239, %s240
      %p254 = scmp.eq.s32.totalorder %s28, 1
      %p255 = por %p253, %p254
      %p257 = scmp.ne.s32.totalorder %s240, %s256
      %p258 = scmp.eq.s32.totalorder %s28, 0
      %p259 = por %p257, %p258
      %s260 = ssub.s32 %s29, %s41
      %s261 = ssub.s32 %s30, %s37
      %s262 = sor.u32 %s260, %s261
      %p263 = scmp.eq.s32.totalorder %s262, 0
      %s265 = sadd.s32 %s264, 1
      %s266 = scalar_select %p263, %s264, %s265
      %p269 = pneg %p263
      %p270 = scmp.eq.s32.totalorder %s22, 1
      %p271 = por %p269, %p270
      %p272 = scmp.ne.s32.totalorder %s264, %s267
      %p273 = scmp.eq.s32.totalorder %s22, 0
      %p274 = por %p272, %p273
      %p275 = scmp.ne.s32.totalorder %s264, %s267
      %p276 = scmp.eq.s32.totalorder %s27, 1
      %p277 = por %p275, %p276
      %p278 = scmp.ne.s32.totalorder %s267, %s268
      %p279 = scmp.eq.s32.totalorder %s27, 0
      %p280 = por %p278, %p279
      %p281 = scmp.ne.s32.totalorder %s267, %s268
      %p282 = scmp.eq.s32.totalorder %s28, 1
      %p283 = por %p281, %p282
      %p285 = scmp.ne.s32.totalorder %s268, %s284
      %p286 = scmp.eq.s32.totalorder %s28, 0
      %p287 = por %p285, %p286
      %s288 = ssub.s32 %s29, %s41
      %s289 = ssub.s32 %s30, %s37
      %s290 = sor.u32 %s288, %s289
      %p291 = scmp.eq.s32.totalorder %s290, 0
      %s293 = sadd.s32 %s292, 1
      %s294 = scalar_select %p291, %s292, %s293
      %p297 = pneg %p291
      %p298 = scmp.eq.s32.totalorder %s22, 1
      %p299 = por %p297, %p298
      %p300 = scmp.ne.s32.totalorder %s292, %s295
      %p301 = scmp.eq.s32.totalorder %s22, 0
      %p302 = por %p300, %p301
      %p303 = scmp.ne.s32.totalorder %s292, %s295
      %p304 = scmp.eq.s32.totalorder %s27, 1
      %p305 = por %p303, %p304
      %p306 = scmp.ne.s32.totalorder %s295, %s296
      %p307 = scmp.eq.s32.totalorder %s27, 0
      %p308 = por %p306, %p307
      %p309 = scmp.ne.s32.totalorder %s295, %s296
      %p310 = scmp.eq.s32.totalorder %s28, 1
      %p311 = por %p309, %p310
      %p313 = scmp.ne.s32.totalorder %s296, %s312
      %p314 = scmp.eq.s32.totalorder %s28, 0
      %p315 = por %p313, %p314
      %p316 = scmp.le.s32.totalorder 1, %s22
      %p317 = scmp.lt.s32.totalorder %s22, 3
      %p318 = pnand %p316, %p317
      %p319 = pneg %p318
      // Predicated region
      $region9: #{tpu_custom_call.1} parent=5 // pred_check
        _
      $region10: #{tpu_custom_call.1} parent=5 // pred_check_branch
        %321 = sbr.rel (%p318) target = $region12
      $region11: #{tpu_custom_call.1} parent=5 // pred_region
        %s322 = ssub.s32 %s22, 1
      $region12: #{tpu_custom_call.1} parent=5 // pred_fallthru
        _
      %p323 = scmp.lt.s32.totalorder %s22, 2
      // Predicated region
      $region13: #{tpu_custom_call.1} parent=5 // pred_check
        %p324 = pneg %p323
      $region14: #{tpu_custom_call.1} parent=5 // pred_check_branch
        %326 = sbr.rel (%p324) target = $region16
      $region15: #{tpu_custom_call.1} parent=5 // pred_region
        // Predicated region
        $region17: #{tpu_custom_call.1} parent=15 // pred_check
          %p327 = pneg %p54
        $region18: #{tpu_custom_call.1} parent=15 // pred_check_branch
          %329 = sbr.rel (%p327) target = $region20
        $region19: #{tpu_custom_call.1} parent=15 // pred_region
          %p330 = scmp.lt.s32.totalorder %s29, 1
          %s331 = scalar_select %p330, %s29, 1
          %s332 = smul.addr %s331, 4
          %s333 = scalar_lea.vmem %s0, %s332
        $region20: #{tpu_custom_call.1} parent=15 // pred_fallthru
          _
        // Predicated region
        $region21: #{tpu_custom_call.1} parent=15 // pred_check
          %p334 = pneg %p82
        $region22: #{tpu_custom_call.1} parent=15 // pred_check_branch
          %336 = sbr.rel (%p334) target = $region24
        $region23: #{tpu_custom_call.1} parent=15 // pred_region
          %p337 = scmp.lt.s32.totalorder %s29, 1
          %s338 = scalar_select %p337, %s29, 1
          %p339 = scmp.lt.s32.totalorder %s30, 0
          %s340 = scalar_select %p339, %s30, 0
          %s341 = smul.addr %s338, 4
          %s342 = sadd.s32 %s340, %s341
          %s343 = smul.addr %s342, 4
          %s344 = scalar_lea.vmem %s1, %s343
        $region24: #{tpu_custom_call.1} parent=15 // pred_fallthru
          _
        // Predicated region
        $region25: #{tpu_custom_call.1} parent=15 // pred_check
          %p345 = pneg %p108
        $region26: #{tpu_custom_call.1} parent=15 // pred_check_branch
          %347 = sbr.rel (%p345) target = $region28
        $region27: #{tpu_custom_call.1} parent=15 // pred_region
          %p348 = scmp.lt.s32.totalorder %s29, 1
          %s349 = scalar_select %p348, %s29, 1
          %s350 = smul.addr %s349, 4
          %s351 = scalar_lea.vmem %s2, %s350
        $region28: #{tpu_custom_call.1} parent=15 // pred_fallthru
          _
        // Predicated region
        $region29: #{tpu_custom_call.1} parent=15 // pred_check
          %p352 = pneg %p136
        $region30: #{tpu_custom_call.1} parent=15 // pred_check_branch
          %354 = sbr.rel (%p352) target = $region32
        $region31: #{tpu_custom_call.1} parent=15 // pred_region
          %p355 = scmp.lt.s32.totalorder %s29, 1
          %s356 = scalar_select %p355, %s29, 1
          %p357 = scmp.lt.s32.totalorder %s30, 0
          %s358 = scalar_select %p357, %s30, 0
          %s359 = smul.addr %s356, 4
          %s360 = sadd.s32 %s358, %s359
          %s361 = smul.addr %s360, 4
          %s362 = scalar_lea.vmem %s3, %s361
        $region32: #{tpu_custom_call.1} parent=15 // pred_fallthru
          _
        // Predicated region
        $region33: #{tpu_custom_call.1} parent=15 // pred_check
          %p363 = pneg %p162
        $region34: #{tpu_custom_call.1} parent=15 // pred_check_branch
          %365 = sbr.rel (%p363) target = $region36
        $region35: #{tpu_custom_call.1} parent=15 // pred_region
          %p366 = scmp.lt.s32.totalorder %s29, 1
          %s367 = scalar_select %p366, %s29, 1
          %s368 = scalar_lea.vmem %s4, %s367
        $region36: #{tpu_custom_call.1} parent=15 // pred_fallthru
          _
        // Predicated region
        $region37: #{tpu_custom_call.1} parent=15 // pred_check
          %p369 = pneg %p190
        $region38: #{tpu_custom_call.1} parent=15 // pred_check_branch
          %371 = sbr.rel (%p369) target = $region40
        $region39: #{tpu_custom_call.1} parent=15 // pred_region
          %p372 = scmp.lt.s32.totalorder %s29, 1
          %s373 = scalar_select %p372, %s29, 1
          %p374 = scmp.lt.s32.totalorder %s30, 0
          %s375 = scalar_select %p374, %s30, 0
          %s376 = sadd.s32 %s375, %s373
          %s377 = scalar_lea.vmem %s5, %s376
        $region40: #{tpu_custom_call.1} parent=15 // pred_fallthru
          _
        // Predicated region
        $region41: #{tpu_custom_call.1} parent=15 // pred_check
          %p378 = pneg %p218
        $region42: #{tpu_custom_call.1} parent=15 // pred_check_branch
          %380 = sbr.rel (%p378) target = $region44
        $region43: #{tpu_custom_call.1} parent=15 // pred_region
          %p381 = scmp.lt.s32.totalorder %s29, 1
          %s382 = scalar_select %p381, %s29, 1
          %p383 = scmp.lt.s32.totalorder %s30, 0
          %s384 = scalar_select %p383, %s30, 0
          %s385 = sadd.s32 %s384, %s382
          %s386 = scalar_lea.vmem %s6, %s385
        $region44: #{tpu_custom_call.1} parent=15 // pred_fallthru
          _
        // Predicated region
        $region45: #{tpu_custom_call.1} parent=15 // pred_check
          %p387 = pneg %p246
        $region46: #{tpu_custom_call.1} parent=15 // pred_check_branch
          %389 = sbr.rel (%p387) target = $region48
        $region47: #{tpu_custom_call.1} parent=15 // pred_region
          %p390 = scmp.lt.s32.totalorder %s29, 1
          %s391 = scalar_select %p390, %s29, 1
          %p392 = scmp.lt.s32.totalorder %s30, 0
          %s393 = scalar_select %p392, %s30, 0
          %s394 = sadd.s32 %s393, %s391
          %s395 = scalar_lea.vmem %s7, %s394
        $region48: #{tpu_custom_call.1} parent=15 // pred_fallthru
          _
      $region16: #{tpu_custom_call.1} parent=5 // pred_fallthru
        _
      %p396 = scmp.le.s32.totalorder 1, %s22
      %p397 = scmp.lt.s32.totalorder %s22, 3
      %p398 = pnand %p396, %p397
      %p399 = pneg %p398
      // Predicated region
      $region49: #{tpu_custom_call.1} parent=5 // pred_check
        _
      $region50: #{tpu_custom_call.1} parent=5 // pred_check_branch
        %401 = sbr.rel (%p398) target = $region52
      $region51: #{tpu_custom_call.1} parent=5 // pred_region
        %s402 = ssub.s32 %s22, 1
        %p403 = scmp.lt.s32.totalorder %s31, 1
        %s404 = scalar_select %p403, %s31, 1
        %s405 = smul.addr %s404, 4
        %s406 = scalar_lea.vmem %s0, %s405
        %p407 = pneg %p60
        %p408 = pneg %p57
        %p409 = scmp.lt.s32.totalorder %s31, 1
        %s410 = scalar_select %p409, %s31, 1
        %p411 = scmp.lt.s32.totalorder %s32, 0
        %s412 = scalar_select %p411, %s32, 0
        %s413 = smul.addr %s410, 4
        %s414 = sadd.s32 %s412, %s413
        %s415 = smul.addr %s414, 4
        %s416 = scalar_lea.vmem %s1, %s415
        %p417 = pneg %p88
        %p418 = pneg %p85
        %p419 = scmp.lt.s32.totalorder %s31, 1
        %s420 = scalar_select %p419, %s31, 1
        %s421 = smul.addr %s420, 4
        %s422 = scalar_lea.vmem %s2, %s421
        %p423 = pneg %p114
        %p424 = pneg %p111
        %p425 = scmp.lt.s32.totalorder %s31, 1
        %s426 = scalar_select %p425, %s31, 1
        %p427 = scmp.lt.s32.totalorder %s32, 0
        %s428 = scalar_select %p427, %s32, 0
        %s429 = smul.addr %s426, 4
        %s430 = sadd.s32 %s428, %s429
        %s431 = smul.addr %s430, 4
        %s432 = scalar_lea.vmem %s3, %s431
        %p433 = pneg %p142
        %p434 = pneg %p139
        %p435 = scmp.lt.s32.totalorder %s31, 1
        %s436 = scalar_select %p435, %s31, 1
        %s437 = scalar_lea.vmem %s4, %s436
        %p438 = pneg %p168
        %p439 = pneg %p165
        %p440 = scmp.lt.s32.totalorder %s31, 1
        %s441 = scalar_select %p440, %s31, 1
        %p442 = scmp.lt.s32.totalorder %s32, 0
        %s443 = scalar_select %p442, %s32, 0
        %s444 = sadd.s32 %s443, %s441
        %s445 = scalar_lea.vmem %s5, %s444
        %p446 = pneg %p196
        %p447 = pneg %p193
        %p448 = scmp.lt.s32.totalorder %s31, 1
        %s449 = scalar_select %p448, %s31, 1
        %p450 = scmp.lt.s32.totalorder %s32, 0
        %s451 = scalar_select %p450, %s32, 0
        %s452 = sadd.s32 %s451, %s449
        %s453 = scalar_lea.vmem %s6, %s452
        %p454 = pneg %p224
        %p455 = pneg %p221
        %p456 = scmp.lt.s32.totalorder %s31, 1
        %s457 = scalar_select %p456, %s31, 1
        %p458 = scmp.lt.s32.totalorder %s32, 0
        %s459 = scalar_select %p458, %s32, 0
        %s460 = sadd.s32 %s459, %s457
        %s461 = scalar_lea.vmem %s7, %s460
        %p462 = pneg %p252
        %p463 = pneg %p249
        %p464 = pneg %p280
        %p465 = pneg %p277
        %s466 = sand.u32 %s267, 1
        %s467 = scalar_lea.sflag [#allocation3], %s466
        %s468 = sand.u32 %s267, 1
        %s469 = scalar_lea.vmem [#allocation2], %s468
        %p470 = pneg %p308
        %p471 = pneg %p305
        %s472 = sand.u32 %s295, 1
        %s473 = scalar_lea.sflag [#allocation5], %s472
        %s474 = sand.u32 %s295, 1
        %s475 = scalar_lea.vmem [#allocation4], %s474
        %p476 = scmp.lt.s32.totalorder %s31, 1
        %s477 = scalar_select %p476, %s31, 1
        %s478 = smul.addr %s477, 4
        %s479 = scalar_lea.vmem %s0, %s478
        %p480 = scmp.lt.s32.totalorder %s31, 1
        %s481 = scalar_select %p480, %s31, 1
        %p482 = scmp.lt.s32.totalorder %s32, 0
        %s483 = scalar_select %p482, %s32, 0
        %s484 = smul.addr %s481, 4
        %s485 = sadd.s32 %s483, %s484
        %s486 = smul.addr %s485, 4
        %s487 = scalar_lea.vmem %s1, %s486
        %p488 = scmp.lt.s32.totalorder %s31, 1
        %s489 = scalar_select %p488, %s31, 1
        %s490 = smul.addr %s489, 4
        %s491 = scalar_lea.vmem %s2, %s490
        %p492 = scmp.lt.s32.totalorder %s31, 1
        %s493 = scalar_select %p492, %s31, 1
        %p494 = scmp.lt.s32.totalorder %s32, 0
        %s495 = scalar_select %p494, %s32, 0
        %s496 = smul.addr %s493, 4
        %s497 = sadd.s32 %s495, %s496
        %s498 = smul.addr %s497, 4
        %s499 = scalar_lea.vmem %s3, %s498
        %p500 = scmp.lt.s32.totalorder %s31, 1
        %s501 = scalar_select %p500, %s31, 1
        %s502 = scalar_lea.vmem %s4, %s501
        %p503 = scmp.lt.s32.totalorder %s31, 1
        %s504 = scalar_select %p503, %s31, 1
        %p505 = scmp.lt.s32.totalorder %s32, 0
        %s506 = scalar_select %p505, %s32, 0
        %s507 = sadd.s32 %s506, %s504
        %s508 = scalar_lea.vmem %s5, %s507
        %p509 = scmp.lt.s32.totalorder %s31, 1
        %s510 = scalar_select %p509, %s31, 1
        %p511 = scmp.lt.s32.totalorder %s32, 0
        %s512 = scalar_select %p511, %s32, 0
        %s513 = sadd.s32 %s512, %s510
        %s514 = scalar_lea.vmem %s6, %s513
        %p515 = scmp.lt.s32.totalorder %s31, 1
        %s516 = scalar_select %p515, %s31, 1
        %p517 = scmp.lt.s32.totalorder %s32, 0
        %s518 = scalar_select %p517, %s32, 0
        %s519 = sadd.s32 %s518, %s516
        %s520 = scalar_lea.vmem %s7, %s519
        %v522 = vld [vmem:[%s487] sm:$0xf]
        %v523 = vld [vmem:[%s487 + $0x4] sm:$0xf]
        %v524 = vld [vmem:[%s487 + $0x8] sm:$0xf]
        %v525 = vld [vmem:[%s487 + $0xc] sm:$0xf]
        %v526 = vld [vmem:[%s499] sm:$0xf]
        %v527 = vld [vmem:[%s499 + $0x4] sm:$0xf]
        %v528 = vld [vmem:[%s499 + $0x8] sm:$0xf]
        %v529 = vld [vmem:[%s499 + $0xc] sm:$0xf]
        %v530 = vld [vmem:[%s508] sm:$0x1]
        %v531 = vlaneseq
        %v532 = vshrl.u32 %v531, 7
        %v533 = vlaneseq
        %v534 = vand.u32 %v533, 127
        %vm535 = vcmp.lt.s32.totalorder %v532, %v534
        // While loop
        $region53: #{tpu_custom_call.1} parent=51 // loop_pre_header
          _
        $region54: #{tpu_custom_call.1} parent=51 // loop_header
          %s537 = sphi 0, %s539
          %p538 = scmp.ge.s32.totalorder %s537, %s32
          %v542 = vphi 0.0, %v695
        $region55: #{tpu_custom_call.1} parent=51 // loop_header_branch
          %541 = sbr.rel (%p538) target = $region59
        $region56: #{tpu_custom_call.1} parent=51 // loop_body
          %s543 = smul.addr %s537, 4
          %s544 = scalar_lea.vmem %s479, %s543
          %v545 = vld [vmem:[%s544] sm:$0xf]
          %s546 = smul.addr %s537, 4
          %s547 = scalar_lea.vmem %s491, %s546
          %v548 = vld [vmem:[%s547] sm:$0xf]
          %s549 = scalar_lea.vmem %s502, %s537
          %v550 = vld [vmem:[%s549] sm:$0x1]
          %v555 = vunpack.c.l.b16 %v522
          %v556 = vunpack.c.l.b16 %v523
          %v557 = vunpack.c.l.b16 %v524
          %v558 = vunpack.c.l.b16 %v525
          %v559 = vpack.c.b16 %v556, %v555
          %v560 = vpack.c.b16 %v558, %v557
          %vm563 = vcmask 261120
          %v565 = vsel %vm563, %v545, 0
          %567 = vmatprep.subr.bf16.mxu0 0
          %568 = vmatpush1.bf16.msra.mxu0 0
          %569 = vmatprep.subr.bf16.mxu0 0
          %570 = vmatpush1.bf16.msra.mxu0 0
          %571 = vmatprep.subr.bf16.mxu0 0
          %572 = vmatpush1.bf16.msra.mxu0 0
          %573 = vmatprep.subr.bf16.mxu0 0
          %574 = vmatpush1.bf16.msra.mxu0 0
          %575 = vmatprep.subr.bf16.mxu0 0
          %576 = vmatpush1.bf16.msra.mxu0 0
          %577 = vmatprep.subr.bf16.mxu0 0
          %578 = vmatpush1.bf16.msra.mxu0 0
          %579 = vmatprep.subr.bf16.mxu0 0
          %580 = vmatpush1.bf16.msra.mxu0 %v560
          %581 = vmatprep.subr.bf16.mxu0 0
          %582 = vmatpush1.bf16.msra.mxu0 %v559
          %583 = vmatprep.subr.bf16.mxu0 0
          %584 = vmatpush2.bf16.msra.mxu0 0
          %585 = vmatprep.subr.bf16.mxu0 0
          %586 = vmatpush2.bf16.msra.mxu0 0
          %587 = vmatprep.subr.bf16.mxu0 0
          %588 = vmatpush2.bf16.msra.mxu0 0
          %589 = vmatprep.subr.bf16.mxu0 0
          %590 = vmatpush2.bf16.msra.mxu0 0
          %591 = vmatprep.subr.bf16.mxu0 0
          %592 = vmatpush2.bf16.msra.mxu0 0
          %593 = vmatprep.subr.bf16.mxu0 0
          %594 = vmatpush2.bf16.msra.mxu0 0
          %595 = vmatprep.subr.bf16.mxu0 0
          %596 = vmatpush2.bf16.msra.mxu0 0
          %597 = vmatprep.subr.bf16.mxu0 0
          %598 = vmatpush2.bf16.msra.mxu0 0
          %599 = vmatprep.mubr.bf16.mxu0 0
          %600 = vmatmul.mubr.bf16.gmra.mxu0 %v565
          %v601 = vpop.f32.mrf.mxu0
          %v602 = vadd.f32 0.0, %v601
          %v603 = vpop.f32.mrf.mxu0
          %v604 = vpop.f32.mrf.mxu0
          %v605 = vpop.f32.mrf.mxu0
          %606 = vdwg.mxu0
          %v611 = vunpack.c.l.b16 %v526
          %v612 = vunpack.c.l.b16 %v527
          %v613 = vunpack.c.l.b16 %v528
          %v614 = vunpack.c.l.b16 %v529
          %v615 = vpack.c.b16 %v612, %v611
          %v616 = vpack.c.b16 %v614, %v613
          %v620 = vsel %vm563, %v548, 0
          %622 = vmatprep.subr.bf16.mxu0 0
          %623 = vmatpush1.bf16.msra.mxu0 0
          %624 = vmatprep.subr.bf16.mxu0 0
          %625 = vmatpush1.bf16.msra.mxu0 0
          %626 = vmatprep.subr.bf16.mxu0 0
          %627 = vmatpush1.bf16.msra.mxu0 0
          %628 = vmatprep.subr.bf16.mxu0 0
          %629 = vmatpush1.bf16.msra.mxu0 0
          %630 = vmatprep.subr.bf16.mxu0 0
          %631 = vmatpush1.bf16.msra.mxu0 0
          %632 = vmatprep.subr.bf16.mxu0 0
          %633 = vmatpush1.bf16.msra.mxu0 0
          %634 = vmatprep.subr.bf16.mxu0 0
          %635 = vmatpush1.bf16.msra.mxu0 %v616
          %636 = vmatprep.subr.bf16.mxu0 0
          %637 = vmatpush1.bf16.msra.mxu0 %v615
          %638 = vmatprep.subr.bf16.mxu0 0
          %639 = vmatpush2.bf16.msra.mxu0 0
          %640 = vmatprep.subr.bf16.mxu0 0
          %641 = vmatpush2.bf16.msra.mxu0 0
          %642 = vmatprep.subr.bf16.mxu0 0
          %643 = vmatpush2.bf16.msra.mxu0 0
          %644 = vmatprep.subr.bf16.mxu0 0
          %645 = vmatpush2.bf16.msra.mxu0 0
          %646 = vmatprep.subr.bf16.mxu0 0
          %647 = vmatpush2.bf16.msra.mxu0 0
          %648 = vmatprep.subr.bf16.mxu0 0
          %649 = vmatpush2.bf16.msra.mxu0 0
          %650 = vmatprep.subr.bf16.mxu0 0
          %651 = vmatpush2.bf16.msra.mxu0 0
          %652 = vmatprep.subr.bf16.mxu0 0
          %653 = vmatpush2.bf16.msra.mxu0 0
          %654 = vmatprep.mubr.bf16.mxu0 0
          %655 = vmatmul.mubr.bf16.gmra.mxu0 %v620
          %v656 = vpop.f32.mrf.mxu0
          %v657 = vadd.f32 1.0, %v656
          %v658 = vpop.f32.mrf.mxu0
          %v659 = vpop.f32.mrf.mxu0
          %v660 = vpop.f32.mrf.mxu0
          %661 = vdwg.mxu0
          %v662 = vmax.f32 %v657, 0.0
          %v663 = vmin.f32 %v662, 10.0
          %v664 = vlaneseq
          %v665 = vshrl.u32 %v664, 7
          %v666 = vsub.s32 0, %v665
          %v667 = vrot.slane %v550, %v666
          %669 = vbcast.lane.b32.xlu0 %v667, 256
          %v670 = vpop.permute.xlu0 %669
          %v672 = vlaneseq
          %v673 = vshrl.u32 %v672, 7
          %v674 = vsub.s32 0, %v673
          %v675 = vrot.slane %v530, %v674
          %v677 = vsub.f32 %v670, %v675
          %v678 = vand.u32 2147483647, %v677
          %v679 = vadd.f32 %v678, 1e-10
          %v680 = vlog2.pop %v679
          %v681 = vmul.f32 %v680, 0.6931472
          %v682 = vmul.f32 %v681, -0.6213349
          %v683 = vmul.f32 %v663, %v682
          %v684 = vmul.f32 %v683, 1.442695
          %v685 = vpow.pop %v684
          %v686 = vmul.f32 %v602, %v685
          %vm687 = vcmask 64512
          %v688 = vsel %vm687, %v686, 0.0
          %v689 = vrot.slane %v688, 4
          %v690 = vadd.f32 %v688, %v689
          %v691 = vrot.slane %v690, 2
          %v692 = vadd.f32 %v690, %v691
          %v693 = vrot.slane %v692, 1
          %v694 = vadd.f32 %v692, %v693
          %v695 = vadd.f32 %v542, %v694
        $region57: #{tpu_custom_call.1} parent=51 // loop_footer
          %s539 = sadd.s32 %s537, 1
        $region58: #{tpu_custom_call.1} parent=51 // loop_footer_branch
          %536 = sbr.rel target = $region54
        $region59: #{tpu_custom_call.1} parent=51 // loop_exit
          _
        %s696 = smul.addr %s32, 4
        %s697 = scalar_lea.vmem %s479, %s696
        %v698 = vld [vmem:[%s697] sm:$0xf]
        %s699 = smul.addr %s32, 4
        %s700 = scalar_lea.vmem %s491, %s699
        %v701 = vld [vmem:[%s700] sm:$0xf]
        %s702 = scalar_lea.vmem %s502, %s32
        %v703 = vld [vmem:[%s702] sm:$0x1]
        %v708 = vunpack.c.l.b16 %v522
        %v709 = vunpack.c.l.b16 %v523
        %v710 = vunpack.c.l.b16 %v524
        %v711 = vunpack.c.l.b16 %v525
        %v712 = vpack.c.b16 %v709, %v708
        %v713 = vpack.c.b16 %v711, %v710
        %vm716 = vcmask 261120
        %v718 = vsel %vm716, %v698, 0
        %720 = vmatprep.subr.bf16.mxu0 0
        %721 = vmatpush1.bf16.msra.mxu0 0
        %722 = vmatprep.subr.bf16.mxu0 0
        %723 = vmatpush1.bf16.msra.mxu0 0
        %724 = vmatprep.subr.bf16.mxu0 0
        %725 = vmatpush1.bf16.msra.mxu0 0
        %726 = vmatprep.subr.bf16.mxu0 0
        %727 = vmatpush1.bf16.msra.mxu0 0
        %728 = vmatprep.subr.bf16.mxu0 0
        %729 = vmatpush1.bf16.msra.mxu0 0
        %730 = vmatprep.subr.bf16.mxu0 0
        %731 = vmatpush1.bf16.msra.mxu0 0
        %732 = vmatprep.subr.bf16.mxu0 0
        %733 = vmatpush1.bf16.msra.mxu0 %v713
        %734 = vmatprep.subr.bf16.mxu0 0
        %735 = vmatpush1.bf16.msra.mxu0 %v712
        %736 = vmatprep.subr.bf16.mxu0 0
        %737 = vmatpush2.bf16.msra.mxu0 0
        %738 = vmatprep.subr.bf16.mxu0 0
        %739 = vmatpush2.bf16.msra.mxu0 0
        %740 = vmatprep.subr.bf16.mxu0 0
        %741 = vmatpush2.bf16.msra.mxu0 0
        %742 = vmatprep.subr.bf16.mxu0 0
        %743 = vmatpush2.bf16.msra.mxu0 0
        %744 = vmatprep.subr.bf16.mxu0 0
        %745 = vmatpush2.bf16.msra.mxu0 0
        %746 = vmatprep.subr.bf16.mxu0 0
        %747 = vmatpush2.bf16.msra.mxu0 0
        %748 = vmatprep.subr.bf16.mxu0 0
        %749 = vmatpush2.bf16.msra.mxu0 0
        %750 = vmatprep.subr.bf16.mxu0 0
        %751 = vmatpush2.bf16.msra.mxu0 0
        %752 = vmatprep.mubr.bf16.mxu0 0
        %753 = vmatmul.mubr.bf16.gmra.mxu0 %v718
        %v754 = vpop.f32.mrf.mxu0
        %v755 = vadd.f32 0.0, %v754
        %v756 = vpop.f32.mrf.mxu0
        %v757 = vpop.f32.mrf.mxu0
        %v758 = vpop.f32.mrf.mxu0
        %759 = vdwg.mxu0
        %v764 = vunpack.c.l.b16 %v526
        %v765 = vunpack.c.l.b16 %v527
        %v766 = vunpack.c.l.b16 %v528
        %v767 = vunpack.c.l.b16 %v529
        %v768 = vpack.c.b16 %v765, %v764
        %v769 = vpack.c.b16 %v767, %v766
        %v773 = vsel %vm716, %v701, 0
        %775 = vmatprep.subr.bf16.mxu0 0
        %776 = vmatpush1.bf16.msra.mxu0 0
        %777 = vmatprep.subr.bf16.mxu0 0
        %778 = vmatpush1.bf16.msra.mxu0 0
        %779 = vmatprep.subr.bf16.mxu0 0
        %780 = vmatpush1.bf16.msra.mxu0 0
        %781 = vmatprep.subr.bf16.mxu0 0
        %782 = vmatpush1.bf16.msra.mxu0 0
        %783 = vmatprep.subr.bf16.mxu0 0
        %784 = vmatpush1.bf16.msra.mxu0 0
        %785 = vmatprep.subr.bf16.mxu0 0
        %786 = vmatpush1.bf16.msra.mxu0 0
        %787 = vmatprep.subr.bf16.mxu0 0
        %788 = vmatpush1.bf16.msra.mxu0 %v769
        %789 = vmatprep.subr.bf16.mxu0 0
        %790 = vmatpush1.bf16.msra.mxu0 %v768
        %791 = vmatprep.subr.bf16.mxu0 0
        %792 = vmatpush2.bf16.msra.mxu0 0
        %793 = vmatprep.subr.bf16.mxu0 0
        %794 = vmatpush2.bf16.msra.mxu0 0
        %795 = vmatprep.subr.bf16.mxu0 0
        %796 = vmatpush2.bf16.msra.mxu0 0
        %797 = vmatprep.subr.bf16.mxu0 0
        %798 = vmatpush2.bf16.msra.mxu0 0
        %799 = vmatprep.subr.bf16.mxu0 0
        %800 = vmatpush2.bf16.msra.mxu0 0
        %801 = vmatprep.subr.bf16.mxu0 0
        %802 = vmatpush2.bf16.msra.mxu0 0
        %803 = vmatprep.subr.bf16.mxu0 0
        %804 = vmatpush2.bf16.msra.mxu0 0
        %805 = vmatprep.subr.bf16.mxu0 0
        %806 = vmatpush2.bf16.msra.mxu0 0
        %807 = vmatprep.mubr.bf16.mxu0 0
        %808 = vmatmul.mubr.bf16.gmra.mxu0 %v773
        %v809 = vpop.f32.mrf.mxu0
        %v810 = vadd.f32 1.0, %v809
        %v811 = vpop.f32.mrf.mxu0
        %v812 = vpop.f32.mrf.mxu0
        %v813 = vpop.f32.mrf.mxu0
        %814 = vdwg.mxu0
        %v815 = vmax.f32 %v810, 0.0
        %v816 = vmin.f32 %v815, 10.0
        %v817 = vlaneseq
        %v818 = vshrl.u32 %v817, 7
        %v819 = vsub.s32 0, %v818
        %v820 = vrot.slane %v703, %v819
        %822 = vbcast.lane.b32.xlu0 %v820, 256
        %v823 = vpop.permute.xlu0 %822
        %v825 = vlaneseq
        %v826 = vshrl.u32 %v825, 7
        %v827 = vsub.s32 0, %v826
        %v828 = vrot.slane %v530, %v827
        %v830 = vsub.f32 %v823, %v828
        %v831 = vand.u32 2147483647, %v830
        %v832 = vadd.f32 %v831, 1e-10
        %v833 = vlog2.pop %v832
        %v834 = vmul.f32 %v833, 0.6931472
        %v835 = vmul.f32 %v834, -0.6213349
        %v836 = vmul.f32 %v816, %v835
        %v837 = vsel %vm535, %v836, -1e+30
        %v838 = vmul.f32 %v837, 1.442695
        %v839 = vpow.pop %v838
        %v840 = vmul.f32 %v755, %v839
        %vm841 = vcmask 64512
        %v842 = vsel %vm841, %v840, 0.0
        %v843 = vrot.slane %v842, 4
        %v844 = vadd.f32 %v842, %v843
        %v845 = vrot.slane %v844, 2
        %v846 = vadd.f32 %v844, %v845
        %v847 = vrot.slane %v846, 1
        %v848 = vadd.f32 %v846, %v847
        %v849 = vadd.f32 %v542, %v848
        %v850 = vld [vmem:[%s514] sm:$0x1]
        %v851 = vld [vmem:[%s520] sm:$0x1]
        %v852 = vadd.f32 %v850, %v851
        %v853 = vadd.f32 %v852, %v849
        %vm854 = vcmask 57344
        %855 = vst.msk [vmem:[%s475] sm:$0x1] %vm854, %v853
        %v856 = vxor.u32 %v853, 2147483648
        %v857 = vmul.f32 %v856, 1.442695
        %v858 = vpow.pop %v857
        %v859 = vadd.f32 %v858, 1.0
        %v860 = vrcp.pop %v859
        %v861 = vmul.f32 1.0, %v860
        %862 = vst.msk [vmem:[%s469] sm:$0x1] %vm854, %v861
        %s863 = sand.u32 %s267, 1
        %s864 = scalar_lea.sflag [#allocation3], %s863
        %s865 = sand.u32 %s267, 1
        %s866 = scalar_lea.vmem [#allocation2], %s865
        %s867 = sand.u32 %s295, 1
        %s868 = scalar_lea.sflag [#allocation5], %s867
        %s869 = sand.u32 %s295, 1
        %s870 = scalar_lea.vmem [#allocation4], %s869
        // Predicated region
        $region60: #{tpu_custom_call.1} parent=51 // pred_check
          %p871 = pneg %p277
        $region61: #{tpu_custom_call.1} parent=51 // pred_check_branch
          %873 = sbr.rel (%p871) target = $region63
        $region62: #{tpu_custom_call.1} parent=51 // pred_region
          %s875 = ssub.s32 16, 16
          %876 = vsyncadd %s864, %s875
          %s877 = sadd.s32 %s32, %s31
          %s878 = smul.addr %s877, 16
          %s879 = scalar_lea.hbm %s8, %s878
          %s881 = sshll.u32 %s866, 4
          %s882 = int_to_ptr.vmem [resolvable:$true] %s881
          %884 = dma.vmem_to_hbm [thread:$0]  %s882, 16, %s879, %s864
        $region63: #{tpu_custom_call.1} parent=51 // pred_fallthru
          _
        // Predicated region
        $region64: #{tpu_custom_call.1} parent=51 // pred_check
          %p885 = pneg %p305
        $region65: #{tpu_custom_call.1} parent=51 // pred_check_branch
          %887 = sbr.rel (%p885) target = $region67
        $region66: #{tpu_custom_call.1} parent=51 // pred_region
          %s889 = ssub.s32 16, 16
          %890 = vsyncadd %s868, %s889
          %s891 = sadd.s32 %s32, %s31
          %s892 = smul.addr %s891, 16
          %s893 = scalar_lea.hbm %s9, %s892
          %s895 = sshll.u32 %s870, 4
          %s896 = int_to_ptr.vmem [resolvable:$true] %s895
          %898 = dma.vmem_to_hbm [thread:$0]  %s896, 16, %s893, %s868
        $region67: #{tpu_custom_call.1} parent=51 // pred_fallthru
          _
      $region52: #{tpu_custom_call.1} parent=5 // pred_fallthru
        _
      %p899 = scmp.le.s32.totalorder 2, %s22
      // Predicated region
      $region68: #{tpu_custom_call.1} parent=5 // pred_check
        %p900 = pneg %p899
      $region69: #{tpu_custom_call.1} parent=5 // pred_check_branch
        %902 = sbr.rel (%p900) target = $region71
      $region70: #{tpu_custom_call.1} parent=5 // pred_region
        %s903 = ssub.s32 %s22, 2
        // Predicated region
        $region72: #{tpu_custom_call.1} parent=70 // pred_check
          %p904 = pneg %p283
        $region73: #{tpu_custom_call.1} parent=70 // pred_check_branch
          %906 = sbr.rel (%p904) target = $region75
        $region74: #{tpu_custom_call.1} parent=70 // pred_region
          %s907 = sand.u32 %s268, 1
          %s908 = scalar_lea.sflag [#allocation3], %s907
          %s909 = sand.u32 %s268, 1
          %s910 = scalar_lea.vmem [#allocation2], %s909
          %911 = dma.done %s908, 16
        $region75: #{tpu_custom_call.1} parent=70 // pred_fallthru
          _
        // Predicated region
        $region76: #{tpu_custom_call.1} parent=70 // pred_check
          %p912 = pneg %p311
        $region77: #{tpu_custom_call.1} parent=70 // pred_check_branch
          %914 = sbr.rel (%p912) target = $region79
        $region78: #{tpu_custom_call.1} parent=70 // pred_region
          %s915 = sand.u32 %s296, 1
          %s916 = scalar_lea.sflag [#allocation5], %s915
          %s917 = sand.u32 %s296, 1
          %s918 = scalar_lea.vmem [#allocation4], %s917
          %919 = dma.done %s916, 16
        $region79: #{tpu_custom_call.1} parent=70 // pred_fallthru
          _
      $region71: #{tpu_custom_call.1} parent=5 // pred_fallthru
        _
    $region6: #{tpu_custom_call.1} parent=1 // loop_footer
      %s26 = sadd.s32 1, %s22
    $region7: #{tpu_custom_call.1} parent=1 // loop_footer_branch
      %21 = sbr.rel target = $region3
    $region8: #{tpu_custom_call.1} parent=1 // loop_exit
      _
    %920 = vsyncpa [#allocation3], 1
    %s921 = scalar_lea.sflag [#allocation3], 1
    %922 = vsyncpa %s921, 1
    %923 = vsyncpa [#allocation5], 1
    %s924 = scalar_lea.sflag [#allocation5], 1
    %925 = vsyncpa %s924, 1

</llo_original>
